<compile_context>
chip_gen: v6e
topology: v6e:2x2x1
jax: 0.10.0
libtpu: 0.0.40
codegen_flags: <defaults>
</compile_context>

<pallas_src>
import jax
import jax.numpy as jnp
from jax.experimental import pallas as pl
from jax.experimental.pallas import tpu as pltpu


# ----------------------------------------------------------------------------
# Fused Pallas kernel: all layers + masked log_softmax in one body.
# ----------------------------------------------------------------------------
def _make_fused_kernel(num_layers, num_classes):
    neg_big = -1e30  # plain Python float: becomes an inline literal, not a
                     # captured traced constant.

    def kernel(a_ref, h_ref, *rest):
        # rest = (w_0, b_0, ..., w_{L-1}, b_{L-1}, o_ref)
        w_refs = rest[0:2 * num_layers:2]
        b_refs = rest[1:2 * num_layers:2]
        o_ref = rest[2 * num_layers]

        a = a_ref[...]                      # already bf16 (cast in wrapper)
        h = h_ref[...]                      # f32 node features
        for li in range(num_layers):        # static unroll at trace time
            w = w_refs[li][...].astype(jnp.bfloat16)
            b = b_refs[li][...]             # (1, dout) f32
            # H @ W  (MXU, bf16 operands, f32 accumulation)
            hw = jnp.dot(h.astype(jnp.bfloat16), w,
                         preferred_element_type=jnp.float32)
            # A @ (H @ W)
            ahw = jnp.dot(a, hw.astype(jnp.bfloat16),
                          preferred_element_type=jnp.float32)
            # bias + relu in f32 (relu on every layer, as in the reference)
            h = jnp.maximum(ahw + b, 0.0)
            # F.dropout(..., training=False) == identity in eval mode.

        # log_softmax along dim=1, masking the zero-padded class lanes.
        n, c_pad = h.shape
        col = jax.lax.broadcasted_iota(jnp.int32, (n, c_pad), 1)
        valid = col < num_classes
        x = jnp.where(valid, h, neg_big)
        m = jnp.max(x, axis=1, keepdims=True)
        s = x - m
        lse = jnp.log(jnp.sum(jnp.where(valid, jnp.exp(s), 0.0),
                              axis=1, keepdims=True))
        o_ref[...] = s - lse                # lane-dense (n, c_pad) store

    return kernel


# ----------------------------------------------------------------------------
# Wrapper: one gridless pallas_call over the whole forward pass.
# ----------------------------------------------------------------------------
def _hypergcn_forward_fused(A, H, weights, biases):
    num_layers = len(weights)
    n = H.shape[0]
    c = weights[-1].shape[1]
    c_pad = ((c + 127) // 128) * 128        # lane-dense output width

    # Zero-pad the last layer's class dim (padding columns stay exactly 0
    # through relu; the kernel's masked log_softmax ignores them).
    w_last = jnp.pad(weights[-1], ((0, 0), (0, c_pad - c)))
    b_last = jnp.pad(biases[-1], (0, c_pad - c))
    ws = list(weights[:-1]) + [w_last]
    bs = [b.reshape(1, -1) for b in (list(biases[:-1]) + [b_last])]

    # Halve A bytes (dominant operand at scale); accumulate in f32 in-kernel.
    a_bf16 = A.astype(jnp.bfloat16)

    operands = [a_bf16, H.astype(jnp.float32)]
    for w, b in zip(ws, bs):
        operands += [w, b]

    # Advisory cost estimate for XLA's scheduler.
    dims = [H.shape[1]] + [w.shape[1] for w in ws]
    flops = 0
    for li in range(num_layers):
        flops += 2 * n * dims[li] * dims[li + 1] + 2 * n * n * dims[li + 1]
    bytes_accessed = (int(a_bf16.size) * 2 + int(H.size) * 4
                      + sum(int(w.size) * 4 for w in ws)
                      + sum(int(b.size) * 4 for b in bs)
                      + n * c_pad * 4)
    cost = pl.CostEstimate(flops=int(flops),
                           transcendentals=int(n * (c_pad + 1)),
                           bytes_accessed=int(bytes_accessed))

    vmem_spec = pl.BlockSpec(memory_space=pltpu.MemorySpace.VMEM)
    out_pad = pl.pallas_call(
        _make_fused_kernel(num_layers, c),
        out_shape=jax.ShapeDtypeStruct((n, c_pad), jnp.float32),
        in_specs=[vmem_spec] * len(operands),
        out_specs=vmem_spec,
        cost_estimate=cost,
    )(*operands)

    return out_pad[:, :c]                   # drop lane padding


@jax.jit
def hypergcn_forward(A, H, weights, biases):
    """l-layer HyperGCN forward (eval mode: dropout is identity)."""
    return _hypergcn_forward_fused(A, H, weights, biases)


# ----------------------------------------------------------------------------
# Deterministic parameter / structure construction (mirrors __init__ shapes)
# ----------------------------------------------------------------------------
def build_params(key, d, depth, c):
    # h = [d]; for i in range(l-1): h.append(2**(l-i+2)); h.append(c)
    h = [d]
    for i in range(depth - 1):
        h.append(2 ** (depth - i + 2))
    h.append(c)
    weights, biases = [], []
    for i in range(depth):
        key, kw, kb = jax.random.split(key, 3)
        std = 1.0 / jnp.sqrt(jnp.float32(h[i + 1]))
        weights.append(jax.random.uniform(
            kw, (h[i], h[i + 1]), jnp.float32, minval=-std, maxval=std))
        biases.append(jax.random.uniform(
            kb, (h[i + 1],), jnp.float32, minval=-std, maxval=std))
    return weights, biases, key


def build_laplacian(key, n):
    """Synthetic dense symmetric normalized Laplacian-like operator (fast mode)."""
    key, k = jax.random.split(key)
    M = jax.random.uniform(k, (n, n), jnp.float32)
    adj = (M > 0.85).astype(jnp.float32)
    adj = jnp.maximum(adj, adj.T)                      # symmetrize
    adj = adj * (1.0 - jnp.eye(n, dtype=jnp.float32))  # no self-loops yet
    adj = adj + jnp.eye(n, dtype=jnp.float32)          # add self-loops
    deg = jnp.sum(adj, axis=1)
    dinv = 1.0 / jnp.sqrt(deg)
    A = adj * dinv[:, None] * dinv[None, :]
    return A, key


def reference_forward(A, H, weights, biases):
    """Pure-JAX reference with the SAME bf16-operand / f32-accumulate math."""
    a = A.astype(jnp.bfloat16)
    h = H.astype(jnp.float32)
    for w, b in zip(weights, biases):
        hw = jnp.dot(h.astype(jnp.bfloat16), w.astype(jnp.bfloat16),
                     preferred_element_type=jnp.float32)
        ahw = jnp.dot(a, hw.astype(jnp.bfloat16),
                      preferred_element_type=jnp.float32)
        h = jnp.maximum(ahw + b.reshape(1, -1), 0.0)
    return jax.nn.log_softmax(h, axis=1)


# ----------------------------------------------------------------------------
if __name__ == "__main__":
    N = 64       # number of hypergraph nodes
    d = 32       # input feature dim (args.d)
    depth = 2    # args.depth
    c = 4        # number of classes (args.c)

    key = jax.random.PRNGKey(0)
    weights, biases, key = build_params(key, d, depth, c)
    A, key = build_laplacian(key, N)
    key, kx = jax.random.split(key)
    H0 = jax.random.normal(kx, (N, d), jnp.float32)

    out = hypergcn_forward(A, H0, weights, biases)
    out = jax.block_until_ready(out)

    assert out.shape == (N, c)
    # log_softmax rows should sum to ~1 in prob space
    assert jnp.allclose(jnp.sum(jnp.exp(out), axis=1), 1.0, atol=1e-4)
    # matches a pure-JAX reference using the same bf16/f32 arithmetic
    ref = reference_forward(A, H0, weights, biases)
    assert jnp.allclose(out, ref, atol=2e-3, rtol=2e-3)
    print("KERNEL_OK")
</pallas_src>

<mosaic_0001>
module attributes {stable_mosaic.version = 11 : i64} {
  func.func @kernel(%arg0: memref<64x64xbf16, #tpu.memory_space<vmem>>, %arg1: memref<64x32xf32, #tpu.memory_space<vmem>>, %arg2: memref<32x16xf32, #tpu.memory_space<vmem>>, %arg3: memref<1x16xf32, #tpu.memory_space<vmem>>, %arg4: memref<16x128xf32, #tpu.memory_space<vmem>>, %arg5: memref<1x128xf32, #tpu.memory_space<vmem>>, %arg6: memref<64x128xf32, #tpu.memory_space<vmem>>) attributes {dimension_semantics = [], scalar_prefetch = 0 : i64, scratch_operands = 0 : i64, tpu.core_type = #tpu.core_type<tc>} {
    %c0 = arith.constant 0 : index
    %c0_0 = arith.constant 0 : index
    %0 = vector.load %arg0[%c0, %c0_0] : memref<64x64xbf16, #tpu.memory_space<vmem>>, vector<64x64xbf16>
    %c0_1 = arith.constant 0 : index
    %c0_2 = arith.constant 0 : index
    %1 = vector.load %arg1[%c0_1, %c0_2] : memref<64x32xf32, #tpu.memory_space<vmem>>, vector<64x32xf32>
    %c0_3 = arith.constant 0 : index
    %c0_4 = arith.constant 0 : index
    %2 = vector.load %arg2[%c0_3, %c0_4] : memref<32x16xf32, #tpu.memory_space<vmem>>, vector<32x16xf32>
    %3 = arith.truncf %2 : vector<32x16xf32> to vector<32x16xbf16>
    %c0_5 = arith.constant 0 : index
    %c0_6 = arith.constant 0 : index
    %4 = vector.load %arg3[%c0_5, %c0_6] : memref<1x16xf32, #tpu.memory_space<vmem>>, vector<1x16xf32>
    %5 = arith.truncf %1 : vector<64x32xf32> to vector<64x32xbf16>
    %cst = arith.constant dense<0.000000e+00> : vector<64x16xf32>
    %6 = tpu.matmul %5, %3, %cst {dimension_numbers = #tpu.dot_dimension_numbers<[1], [0], [0], [1], [0, 0, 1, 1], [], []>} : vector<64x32xbf16>, vector<32x16xbf16>, vector<64x16xf32> -> vector<64x16xf32>
    %7 = arith.truncf %6 : vector<64x16xf32> to vector<64x16xbf16>
    %cst_7 = arith.constant dense<0.000000e+00> : vector<64x16xf32>
    %8 = tpu.matmul %0, %7, %cst_7 {dimension_numbers = #tpu.dot_dimension_numbers<[1], [0], [0], [1], [0, 0, 1, 1], [], []>} : vector<64x64xbf16>, vector<64x16xbf16>, vector<64x16xf32> -> vector<64x16xf32>
    %9 = vector.broadcast %4 : vector<1x16xf32> to vector<64x16xf32>
    %10 = arith.addf %8, %9 : vector<64x16xf32>
    %cst_8 = arith.constant 0.000000e+00 : f32
    %11 = vector.broadcast %cst_8 : f32 to vector<64x16xf32>
    %12 = arith.maximumf %10, %11 : vector<64x16xf32>
    %c0_9 = arith.constant 0 : index
    %c0_10 = arith.constant 0 : index
    %13 = vector.load %arg4[%c0_9, %c0_10] : memref<16x128xf32, #tpu.memory_space<vmem>>, vector<16x128xf32>
    %14 = arith.truncf %13 : vector<16x128xf32> to vector<16x128xbf16>
    %c0_11 = arith.constant 0 : index
    %c0_12 = arith.constant 0 : index
    %15 = vector.load %arg5[%c0_11, %c0_12] : memref<1x128xf32, #tpu.memory_space<vmem>>, vector<1x128xf32>
    %16 = arith.truncf %12 : vector<64x16xf32> to vector<64x16xbf16>
    %cst_13 = arith.constant dense<0.000000e+00> : vector<64x128xf32>
    %17 = tpu.matmul %16, %14, %cst_13 {dimension_numbers = #tpu.dot_dimension_numbers<[1], [0], [0], [1], [0, 0, 1, 1], [], []>} : vector<64x16xbf16>, vector<16x128xbf16>, vector<64x128xf32> -> vector<64x128xf32>
    %18 = arith.truncf %17 : vector<64x128xf32> to vector<64x128xbf16>
    %cst_14 = arith.constant dense<0.000000e+00> : vector<64x128xf32>
    %19 = tpu.matmul %0, %18, %cst_14 {dimension_numbers = #tpu.dot_dimension_numbers<[1], [0], [0], [1], [0, 0, 1, 1], [], []>} : vector<64x64xbf16>, vector<64x128xbf16>, vector<64x128xf32> -> vector<64x128xf32>
    %20 = vector.broadcast %15 : vector<1x128xf32> to vector<64x128xf32>
    %21 = arith.addf %19, %20 : vector<64x128xf32>
    %cst_15 = arith.constant 0.000000e+00 : f32
    %22 = vector.broadcast %cst_15 : f32 to vector<64x128xf32>
    %23 = arith.maximumf %21, %22 : vector<64x128xf32>
    %24 = tpu.iota {dimensions = array<i32: 1>} : vector<64x128xi32>
    %c4_i32 = arith.constant 4 : i32
    %25 = vector.broadcast %c4_i32 : i32 to vector<64x128xi32>
    %26 = arith.cmpi slt, %24, %25 : vector<64x128xi32>
    %cst_16 = arith.constant -1.000000e+30 : f32
    %27 = vector.broadcast %cst_16 : f32 to vector<64x128xf32>
    %28 = arith.select %26, %23, %27 : vector<64x128xi1>, vector<64x128xf32>
    %cst_17 = arith.constant dense<0xFF800000> : vector<64xf32>
    %29 = vector.multi_reduction <maximumf>, %28, %cst_17 [1] : vector<64x128xf32> to vector<64xf32>
    %30 = vector.shape_cast %29 : vector<64xf32> to vector<64x1xf32>
    %31 = vector.broadcast %30 : vector<64x1xf32> to vector<64x128xf32>
    %32 = arith.subf %28, %31 : vector<64x128xf32>
    %33 = math.exp %32 : vector<64x128xf32>
    %cst_18 = arith.constant 0.000000e+00 : f32
    %34 = vector.broadcast %cst_18 : f32 to vector<64x128xf32>
    %35 = arith.select %26, %33, %34 : vector<64x128xi1>, vector<64x128xf32>
    %cst_19 = arith.constant dense<0.000000e+00> : vector<64xf32>
    %36 = vector.multi_reduction <add>, %35, %cst_19 [1] : vector<64x128xf32> to vector<64xf32>
    %37 = vector.shape_cast %36 : vector<64xf32> to vector<64x1xf32>
    %38 = math.log %37 : vector<64x1xf32>
    %39 = vector.broadcast %38 : vector<64x1xf32> to vector<64x128xf32>
    %40 = arith.subf %32, %39 : vector<64x128xf32>
    %c0_20 = arith.constant 0 : index
    %c0_21 = arith.constant 0 : index
    %41 = vector.load %arg6[%c0_20, %c0_21] : memref<64x128xf32, #tpu.memory_space<vmem>>, vector<64x128xf32>
    tpu.vector_store %arg6[%c0_20, %c0_21], %40 {strides = array<i32>} : memref<64x128xf32, #tpu.memory_space<vmem>>, vector<64x128xf32>,
    return
  }
}

</mosaic_0001>

<llo_original>
// kernel: hypergcn_forward.1
$region0: #{hypergcn_forward.1}
  #allocation0 [shape = 'u32[]', space=smem, size = 0x4, offset = 0x4, fixed_abs, tag = 'smem constant byte address 0x4 - core index']
  #allocation1 [shape = 'u32[144,128]{1,0:T(1,128)}', space=vmem, size = 0x12000, scoped, tag = 'internal scratch']
  %s0 = inlined_call_operand.vmem [shape: bf16[64,64], index: 0, kind: input, shape index: {}]
  %s1 = inlined_call_operand.vmem [shape: f32[64,32], index: 1, kind: input, shape index: {}]
  %s2 = inlined_call_operand.vmem [shape: f32[32,16], index: 2, kind: input, shape index: {}]
  %s3 = inlined_call_operand.vmem [shape: f32[1,16], index: 3, kind: input, shape index: {}]
  %s4 = inlined_call_operand.vmem [shape: f32[16,128], index: 4, kind: input, shape index: {}]
  %s5 = inlined_call_operand.vmem [shape: f32[1,128], index: 5, kind: input, shape index: {}]
  %s6 = inlined_call_operand.vmem [shape: f32[64,128], index: 6, kind: output, shape index: {}]
  %s7 = sld [smem:[#allocation0]]
  $region34: #{hypergcn_forward.1} parent=0
    _
  %s9 = ssub.s32 1, %s7
  %s10 = scalar_select 0, %s9, %s7
  // Predicated region
  $region2: #{hypergcn_forward.1} parent=0 // pred_check
    _
  $region3: #{hypergcn_forward.1} parent=0 // pred_check_branch
    %12 = sbr.rel (0) target = $region5
  $region4: #{hypergcn_forward.1} parent=0 // pred_region
    _
  $region5: #{hypergcn_forward.1} parent=0 // pred_fallthru
    _
  // Predicated region
  $region6: #{hypergcn_forward.1} parent=0 // pred_check
    _
  $region7: #{hypergcn_forward.1} parent=0 // pred_check_branch
    %14 = sbr.rel (0) target = $region9
  $region8: #{hypergcn_forward.1} parent=0 // pred_region
    _
  $region9: #{hypergcn_forward.1} parent=0 // pred_fallthru
    _
  // Predicated region
  $region10: #{hypergcn_forward.1} parent=0 // pred_check
    _
  $region11: #{hypergcn_forward.1} parent=0 // pred_check_branch
    %16 = sbr.rel (0) target = $region13
  $region12: #{hypergcn_forward.1} parent=0 // pred_region
    _
  $region13: #{hypergcn_forward.1} parent=0 // pred_fallthru
    _
  // Predicated region
  $region14: #{hypergcn_forward.1} parent=0 // pred_check
    _
  $region15: #{hypergcn_forward.1} parent=0 // pred_check_branch
    %18 = sbr.rel (0) target = $region17
  $region16: #{hypergcn_forward.1} parent=0 // pred_region
    _
  $region17: #{hypergcn_forward.1} parent=0 // pred_fallthru
    _
  // Predicated region
  $region18: #{hypergcn_forward.1} parent=0 // pred_check
    _
  $region19: #{hypergcn_forward.1} parent=0 // pred_check_branch
    %20 = sbr.rel (0) target = $region21
  $region20: #{hypergcn_forward.1} parent=0 // pred_region
    _
  $region21: #{hypergcn_forward.1} parent=0 // pred_fallthru
    _
  // Predicated region
  $region22: #{hypergcn_forward.1} parent=0 // pred_check
    _
  $region23: #{hypergcn_forward.1} parent=0 // pred_check_branch
    %22 = sbr.rel (0) target = $region25
  $region24: #{hypergcn_forward.1} parent=0 // pred_region
    _
  $region25: #{hypergcn_forward.1} parent=0 // pred_fallthru
    _
  %v24 = vld [vmem:[%s0] sm:$0xf]
  %v25 = vld [vmem:[%s0 + $0x4] sm:$0xf]
  %v26 = vld [vmem:[%s0 + $0x8] sm:$0xf]
  %v27 = vld [vmem:[%s0 + $0xc] sm:$0xf]
  %v28 = vld [vmem:[%s0 + $0x10] sm:$0xf]
  %v29 = vld [vmem:[%s0 + $0x14] sm:$0xf]
  %v30 = vld [vmem:[%s0 + $0x18] sm:$0xf]
  %v31 = vld [vmem:[%s0 + $0x1c] sm:$0xf]
  %v32 = vld [vmem:[%s1] sm:$0xff]
  %v33 = vld [vmem:[%s1 + $0x8] sm:$0xff]
  %v34 = vld [vmem:[%s1 + $0x10] sm:$0xff]
  %v35 = vld [vmem:[%s1 + $0x18] sm:$0xff]
  %v36 = vld [vmem:[%s1 + $0x20] sm:$0xff]
  %v37 = vld [vmem:[%s1 + $0x28] sm:$0xff]
  %v38 = vld [vmem:[%s1 + $0x30] sm:$0xff]
  %v39 = vld [vmem:[%s1 + $0x38] sm:$0xff]
  %v40 = vld [vmem:[%s2] sm:$0xff]
  %v41 = vld [vmem:[%s2 + $0x8] sm:$0xff]
  %v42 = vld [vmem:[%s2 + $0x10] sm:$0xff]
  %v43 = vld [vmem:[%s2 + $0x18] sm:$0xff]
  %v44 = vpack.c.bf16 %v41, %v40
  %v45 = vpack.c.bf16 %v43, %v42
  %v46 = vld [vmem:[%s3] sm:$0x1]
  %v47 = vpack.c.bf16 %v33, %v32
  %v48 = vpack.c.bf16 %v35, %v34
  %v49 = vpack.c.bf16 %v37, %v36
  %v50 = vpack.c.bf16 %v39, %v38
  %vm51 = vcmask 261120
  %v53 = vsel %vm51, %v47, 0
  %v56 = vsel %vm51, %v48, 0
  %v59 = vsel %vm51, %v49, 0
  %v62 = vsel %vm51, %v50, 0
  %64 = vmatprep.subr.bf16.mxu0 0
  %65 = vmatpush1.bf16.msra.mxu0 0
  %66 = vmatprep.subr.bf16.mxu0 0
  %67 = vmatpush1.bf16.msra.mxu0 0
  %68 = vmatprep.subr.bf16.mxu0 0
  %69 = vmatpush1.bf16.msra.mxu0 0
  %70 = vmatprep.subr.bf16.mxu0 0
  %71 = vmatpush1.bf16.msra.mxu0 0
  %72 = vmatprep.subr.bf16.mxu0 0
  %73 = vmatpush1.bf16.msra.mxu0 0
  %74 = vmatprep.subr.bf16.mxu0 0
  %75 = vmatpush1.bf16.msra.mxu0 0
  %76 = vmatprep.subr.bf16.mxu0 0
  %77 = vmatpush1.bf16.msra.mxu0 %v45
  %78 = vmatprep.subr.bf16.mxu0 0
  %79 = vmatpush1.bf16.msra.mxu0 %v44
  %80 = vmatprep.subr.bf16.mxu0 0
  %81 = vmatpush2.bf16.msra.mxu0 0
  %82 = vmatprep.subr.bf16.mxu0 0
  %83 = vmatpush2.bf16.msra.mxu0 0
  %84 = vmatprep.subr.bf16.mxu0 0
  %85 = vmatpush2.bf16.msra.mxu0 0
  %86 = vmatprep.subr.bf16.mxu0 0
  %87 = vmatpush2.bf16.msra.mxu0 0
  %88 = vmatprep.subr.bf16.mxu0 0
  %89 = vmatpush2.bf16.msra.mxu0 0
  %90 = vmatprep.subr.bf16.mxu0 0
  %91 = vmatpush2.bf16.msra.mxu0 0
  %92 = vmatprep.subr.bf16.mxu0 0
  %93 = vmatpush2.bf16.msra.mxu0 0
  %94 = vmatprep.subr.bf16.mxu0 0
  %95 = vmatpush2.bf16.msra.mxu0 0
  %96 = vmatprep.mubr.bf16.mxu0 0
  %97 = vmatmul.mubr.bf16.gmra.mxu0 %v53
  %v98 = vpop.f32.mrf.mxu0
  %v99 = vadd.f32 0.0, %v98
  %v100 = vpop.f32.mrf.mxu0
  %v101 = vpop.f32.mrf.mxu0
  %v102 = vadd.f32 0.0, %v101
  %v103 = vpop.f32.mrf.mxu0
  %104 = vmatprep.mubr.bf16.mxu0 0
  %105 = vmatmul.mubr.bf16.gmra.mxu0 %v56
  %v106 = vpop.f32.mrf.mxu0
  %v107 = vadd.f32 0.0, %v106
  %v108 = vpop.f32.mrf.mxu0
  %v109 = vpop.f32.mrf.mxu0
  %v110 = vadd.f32 0.0, %v109
  %v111 = vpop.f32.mrf.mxu0
  %112 = vmatprep.mubr.bf16.mxu0 0
  %113 = vmatmul.mubr.bf16.gmra.mxu0 %v59
  %v114 = vpop.f32.mrf.mxu0
  %v115 = vadd.f32 0.0, %v114
  %v116 = vpop.f32.mrf.mxu0
  %v117 = vpop.f32.mrf.mxu0
  %v118 = vadd.f32 0.0, %v117
  %v119 = vpop.f32.mrf.mxu0
  %120 = vmatprep.mubr.bf16.mxu0 0
  %121 = vmatmul.mubr.bf16.gmra.mxu0 %v62
  %v122 = vpop.f32.mrf.mxu0
  %v123 = vadd.f32 0.0, %v122
  %v124 = vpop.f32.mrf.mxu0
  %v125 = vpop.f32.mrf.mxu0
  %v126 = vadd.f32 0.0, %v125
  %v127 = vpop.f32.mrf.mxu0
  %128 = vdwg.mxu0
  %v129 = vpack.c.bf16 %v102, %v99
  %v130 = vpack.c.bf16 %v110, %v107
  %v131 = vpack.c.bf16 %v118, %v115
  %v132 = vpack.c.bf16 %v126, %v123
  %v134 = vlaneseq
  %v135 = vshrl.u32 %v134, 7
  %v136 = vsub.s32 0, %v135
  %v137 = vrot.slane %v46, %v136
  %v147 = vunpack.c.l.b16 %v24
  %v148 = vunpack.c.l.b16 %v25
  %v149 = vunpack.c.l.b16 %v26
  %v150 = vunpack.c.l.b16 %v27
  %v151 = vunpack.c.l.b16 %v28
  %v152 = vunpack.c.l.b16 %v29
  %v153 = vunpack.c.l.b16 %v30
  %v154 = vunpack.c.l.b16 %v31
  %v155 = vpack.c.b16 %v148, %v147
  %v156 = vpack.c.b16 %v150, %v149
  %v157 = vpack.c.b16 %v152, %v151
  %v158 = vpack.c.b16 %v154, %v153
  %vm159 = vcmask 523264
  %v161 = vsel %vm159, %v155, 0
  %v164 = vsel %vm159, %v156, 0
  %v167 = vsel %vm159, %v157, 0
  %v170 = vsel %vm159, %v158, 0
  %172 = vmatprep.subr.bf16.mxu0 0
  %173 = vmatpush1.bf16.msra.mxu0 0
  %174 = vmatprep.subr.bf16.mxu0 0
  %175 = vmatpush1.bf16.msra.mxu0 0
  %176 = vmatprep.subr.bf16.mxu0 0
  %177 = vmatpush1.bf16.msra.mxu0 0
  %178 = vmatprep.subr.bf16.mxu0 0
  %179 = vmatpush1.bf16.msra.mxu0 0
  %180 = vmatprep.subr.bf16.mxu0 0
  %181 = vmatpush1.bf16.msra.mxu0 %v132
  %182 = vmatprep.subr.bf16.mxu0 0
  %183 = vmatpush1.bf16.msra.mxu0 %v131
  %184 = vmatprep.subr.bf16.mxu0 0
  %185 = vmatpush1.bf16.msra.mxu0 %v130
  %186 = vmatprep.subr.bf16.mxu0 0
  %187 = vmatpush1.bf16.msra.mxu0 %v129
  %188 = vmatprep.subr.bf16.mxu0 0
  %189 = vmatpush2.bf16.msra.mxu0 0
  %190 = vmatprep.subr.bf16.mxu0 0
  %191 = vmatpush2.bf16.msra.mxu0 0
  %192 = vmatprep.subr.bf16.mxu0 0
  %193 = vmatpush2.bf16.msra.mxu0 0
  %194 = vmatprep.subr.bf16.mxu0 0
  %195 = vmatpush2.bf16.msra.mxu0 0
  %196 = vmatprep.subr.bf16.mxu0 0
  %197 = vmatpush2.bf16.msra.mxu0 0
  %198 = vmatprep.subr.bf16.mxu0 0
  %199 = vmatpush2.bf16.msra.mxu0 0
  %200 = vmatprep.subr.bf16.mxu0 0
  %201 = vmatpush2.bf16.msra.mxu0 0
  %202 = vmatprep.subr.bf16.mxu0 0
  %203 = vmatpush2.bf16.msra.mxu0 0
  %204 = vmatprep.mubr.bf16.mxu0 0
  %205 = vmatmul.mubr.bf16.gmra.mxu0 %v161
  %v206 = vpop.f32.mrf.mxu0
  %v207 = vadd.f32 %v137, %v206
  %v208 = vpop.f32.mrf.mxu0
  %v209 = vpop.f32.mrf.mxu0
  %v210 = vadd.f32 %v137, %v209
  %v211 = vpop.f32.mrf.mxu0
  %212 = vmatprep.mubr.bf16.mxu0 0
  %213 = vmatmul.mubr.bf16.gmra.mxu0 %v164
  %v214 = vpop.f32.mrf.mxu0
  %v215 = vadd.f32 %v137, %v214
  %v216 = vpop.f32.mrf.mxu0
  %v217 = vpop.f32.mrf.mxu0
  %v218 = vadd.f32 %v137, %v217
  %v219 = vpop.f32.mrf.mxu0
  %220 = vmatprep.mubr.bf16.mxu0 0
  %221 = vmatmul.mubr.bf16.gmra.mxu0 %v167
  %v222 = vpop.f32.mrf.mxu0
  %v223 = vadd.f32 %v137, %v222
  %v224 = vpop.f32.mrf.mxu0
  %v225 = vpop.f32.mrf.mxu0
  %v226 = vadd.f32 %v137, %v225
  %v227 = vpop.f32.mrf.mxu0
  %228 = vmatprep.mubr.bf16.mxu0 0
  %229 = vmatmul.mubr.bf16.gmra.mxu0 %v170
  %v230 = vpop.f32.mrf.mxu0
  %v231 = vadd.f32 %v137, %v230
  %v232 = vpop.f32.mrf.mxu0
  %v233 = vpop.f32.mrf.mxu0
  %v234 = vadd.f32 %v137, %v233
  %v235 = vpop.f32.mrf.mxu0
  %236 = vdwg.mxu0
  %v237 = vmax.f32 %v207, 0.0
  %v238 = vmax.f32 %v210, 0.0
  %v239 = vmax.f32 %v215, 0.0
  %v240 = vmax.f32 %v218, 0.0
  %v241 = vmax.f32 %v223, 0.0
  %v242 = vmax.f32 %v226, 0.0
  %v243 = vmax.f32 %v231, 0.0
  %v244 = vmax.f32 %v234, 0.0
  %v245 = vld [vmem:[%s4] sm:$0xff]
  %v246 = vld [vmem:[%s4 + $0x8] sm:$0xff]
  %v247 = vpack.c.bf16 %v246, %v245
  %v248 = vld [vmem:[%s5] sm:$0x1]
  %v249 = vpack.c.bf16 %v238, %v237
  %v250 = vpack.c.bf16 %v240, %v239
  %v251 = vpack.c.bf16 %v242, %v241
  %v252 = vpack.c.bf16 %v244, %v243
  %vm253 = vcmask 130048
  %v255 = vsel %vm253, %v249, 0
  %v258 = vsel %vm253, %v250, 0
  %v261 = vsel %vm253, %v251, 0
  %v264 = vsel %vm253, %v252, 0
  %266 = vmatprep.subr.bf16.mxu0 0
  %267 = vmatpush1.bf16.msra.mxu0 0
  %268 = vmatprep.subr.bf16.mxu0 0
  %269 = vmatpush1.bf16.msra.mxu0 0
  %270 = vmatprep.subr.bf16.mxu0 0
  %271 = vmatpush1.bf16.msra.mxu0 0
  %272 = vmatprep.subr.bf16.mxu0 0
  %273 = vmatpush1.bf16.msra.mxu0 0
  %274 = vmatprep.subr.bf16.mxu0 0
  %275 = vmatpush1.bf16.msra.mxu0 0
  %276 = vmatprep.subr.bf16.mxu0 0
  %277 = vmatpush1.bf16.msra.mxu0 0
  %278 = vmatprep.subr.bf16.mxu0 0
  %279 = vmatpush1.bf16.msra.mxu0 0
  %280 = vmatprep.subr.bf16.mxu0 0
  %281 = vmatpush1.bf16.msra.mxu0 %v247
  %282 = vmatprep.subr.bf16.mxu0 0
  %283 = vmatpush2.bf16.msra.mxu0 0
  %284 = vmatprep.subr.bf16.mxu0 0
  %285 = vmatpush2.bf16.msra.mxu0 0
  %286 = vmatprep.subr.bf16.mxu0 0
  %287 = vmatpush2.bf16.msra.mxu0 0
  %288 = vmatprep.subr.bf16.mxu0 0
  %289 = vmatpush2.bf16.msra.mxu0 0
  %290 = vmatprep.subr.bf16.mxu0 0
  %291 = vmatpush2.bf16.msra.mxu0 0
  %292 = vmatprep.subr.bf16.mxu0 0
  %293 = vmatpush2.bf16.msra.mxu0 0
  %294 = vmatprep.subr.bf16.mxu0 0
  %295 = vmatpush2.bf16.msra.mxu0 0
  %296 = vmatprep.subr.bf16.mxu0 0
  %297 = vmatpush2.bf16.msra.mxu0 0
  %298 = vmatprep.mubr.bf16.mxu0 0
  %299 = vmatmul.mubr.bf16.gmra.mxu0 %v255
  %v300 = vpop.f32.mrf.mxu0
  %v301 = vadd.f32 0.0, %v300
  %v302 = vpop.f32.mrf.mxu0
  %v303 = vpop.f32.mrf.mxu0
  %v304 = vadd.f32 0.0, %v303
  %v305 = vpop.f32.mrf.mxu0
  %306 = vmatprep.mubr.bf16.mxu0 0
  %307 = vmatmul.mubr.bf16.gmra.mxu0 %v258
  %v308 = vpop.f32.mrf.mxu0
  %v309 = vadd.f32 0.0, %v308
  %v310 = vpop.f32.mrf.mxu0
  %v311 = vpop.f32.mrf.mxu0
  %v312 = vadd.f32 0.0, %v311
  %v313 = vpop.f32.mrf.mxu0
  %314 = vmatprep.mubr.bf16.mxu0 0
  %315 = vmatmul.mubr.bf16.gmra.mxu0 %v261
  %v316 = vpop.f32.mrf.mxu0
  %v317 = vadd.f32 0.0, %v316
  %v318 = vpop.f32.mrf.mxu0
  %v319 = vpop.f32.mrf.mxu0
  %v320 = vadd.f32 0.0, %v319
  %v321 = vpop.f32.mrf.mxu0
  %322 = vmatprep.mubr.bf16.mxu0 0
  %323 = vmatmul.mubr.bf16.gmra.mxu0 %v264
  %v324 = vpop.f32.mrf.mxu0
  %v325 = vadd.f32 0.0, %v324
  %v326 = vpop.f32.mrf.mxu0
  %v327 = vpop.f32.mrf.mxu0
  %v328 = vadd.f32 0.0, %v327
  %v329 = vpop.f32.mrf.mxu0
  %330 = vdwg.mxu0
  %v331 = vpack.c.bf16 %v304, %v301
  %v332 = vpack.c.bf16 %v312, %v309
  %v333 = vpack.c.bf16 %v320, %v317
  %v334 = vpack.c.bf16 %v328, %v325
  %v336 = vlaneseq
  %v337 = vshrl.u32 %v336, 7
  %v338 = vsub.s32 0, %v337
  %v339 = vrot.slane %v248, %v338
  %341 = vmatprep.subr.bf16.mxu0 0
  %342 = vmatpush1.bf16.msra.mxu0 0
  %343 = vmatprep.subr.bf16.mxu0 0
  %344 = vmatpush1.bf16.msra.mxu0 0
  %345 = vmatprep.subr.bf16.mxu0 0
  %346 = vmatpush1.bf16.msra.mxu0 0
  %347 = vmatprep.subr.bf16.mxu0 0
  %348 = vmatpush1.bf16.msra.mxu0 0
  %349 = vmatprep.subr.bf16.mxu0 0
  %350 = vmatpush1.bf16.msra.mxu0 %v334
  %351 = vmatprep.subr.bf16.mxu0 0
  %352 = vmatpush1.bf16.msra.mxu0 %v333
  %353 = vmatprep.subr.bf16.mxu0 0
  %354 = vmatpush1.bf16.msra.mxu0 %v332
  %355 = vmatprep.subr.bf16.mxu0 0
  %356 = vmatpush1.bf16.msra.mxu0 %v331
  %357 = vmatprep.subr.bf16.mxu0 0
  %358 = vmatpush2.bf16.msra.mxu0 0
  %359 = vmatprep.subr.bf16.mxu0 0
  %360 = vmatpush2.bf16.msra.mxu0 0
  %361 = vmatprep.subr.bf16.mxu0 0
  %362 = vmatpush2.bf16.msra.mxu0 0
  %363 = vmatprep.subr.bf16.mxu0 0
  %364 = vmatpush2.bf16.msra.mxu0 0
  %365 = vmatprep.subr.bf16.mxu0 0
  %366 = vmatpush2.bf16.msra.mxu0 0
  %367 = vmatprep.subr.bf16.mxu0 0
  %368 = vmatpush2.bf16.msra.mxu0 0
  %369 = vmatprep.subr.bf16.mxu0 0
  %370 = vmatpush2.bf16.msra.mxu0 0
  %371 = vmatprep.subr.bf16.mxu0 0
  %372 = vmatpush2.bf16.msra.mxu0 0
  %373 = vmatprep.mubr.bf16.mxu0 0
  %374 = vmatmul.mubr.bf16.gmra.mxu0 %v161
  %v375 = vpop.f32.mrf.mxu0
  %v376 = vadd.f32 %v339, %v375
  %v377 = vpop.f32.mrf.mxu0
  %v378 = vpop.f32.mrf.mxu0
  %v379 = vadd.f32 %v339, %v378
  %v380 = vpop.f32.mrf.mxu0
  %381 = vmatprep.mubr.bf16.mxu0 0
  %382 = vmatmul.mubr.bf16.gmra.mxu0 %v164
  %v383 = vpop.f32.mrf.mxu0
  %v384 = vadd.f32 %v339, %v383
  %v385 = vpop.f32.mrf.mxu0
  %v386 = vpop.f32.mrf.mxu0
  %v387 = vadd.f32 %v339, %v386
  %v388 = vpop.f32.mrf.mxu0
  %389 = vmatprep.mubr.bf16.mxu0 0
  %390 = vmatmul.mubr.bf16.gmra.mxu0 %v167
  %v391 = vpop.f32.mrf.mxu0
  %v392 = vadd.f32 %v339, %v391
  %v393 = vpop.f32.mrf.mxu0
  %v394 = vpop.f32.mrf.mxu0
  %v395 = vadd.f32 %v339, %v394
  %v396 = vpop.f32.mrf.mxu0
  %397 = vmatprep.mubr.bf16.mxu0 0
  %398 = vmatmul.mubr.bf16.gmra.mxu0 %v170
  %v399 = vpop.f32.mrf.mxu0
  %v400 = vadd.f32 %v339, %v399
  %v401 = vpop.f32.mrf.mxu0
  %v402 = vpop.f32.mrf.mxu0
  %v403 = vadd.f32 %v339, %v402
  %v404 = vpop.f32.mrf.mxu0
  %405 = vdwg.mxu0
  %v406 = vmax.f32 %v376, 0.0
  %v407 = vmax.f32 %v379, 0.0
  %v408 = vmax.f32 %v384, 0.0
  %v409 = vmax.f32 %v387, 0.0
  %v410 = vmax.f32 %v392, 0.0
  %v411 = vmax.f32 %v395, 0.0
  %v412 = vmax.f32 %v400, 0.0
  %v413 = vmax.f32 %v403, 0.0
  %v414 = vlaneseq
  %v415 = vand.u32 %v414, 127
  %vm416 = vcmp.lt.s32.totalorder %v415, 4
  %v417 = vsel %vm416, %v406, -1e+30
  %v418 = vsel %vm416, %v407, -1e+30
  %v419 = vsel %vm416, %v408, -1e+30
  %v420 = vsel %vm416, %v409, -1e+30
  %v421 = vsel %vm416, %v410, -1e+30
  %v422 = vsel %vm416, %v411, -1e+30
  %v423 = vsel %vm416, %v412, -1e+30
  %v424 = vsel %vm416, %v413, -1e+30
  %425 = vmax.xlane.f32.xlu0 %v417
  %v426 = vpop.xlane.xlu0 %425
  %427 = vmax.xlane.f32.xlu0 %v418
  %v428 = vpop.xlane.xlu0 %427
  %429 = vmax.xlane.f32.xlu0 %v419
  %v430 = vpop.xlane.xlu0 %429
  %431 = vmax.xlane.f32.xlu0 %v420
  %v432 = vpop.xlane.xlu0 %431
  %433 = vmax.xlane.f32.xlu0 %v421
  %v434 = vpop.xlane.xlu0 %433
  %435 = vmax.xlane.f32.xlu0 %v422
  %v436 = vpop.xlane.xlu0 %435
  %437 = vmax.xlane.f32.xlu0 %v423
  %v438 = vpop.xlane.xlu0 %437
  %439 = vmax.xlane.f32.xlu0 %v424
  %v440 = vpop.xlane.xlu0 %439
  %v441 = vsub.f32 %v417, %v426
  %v442 = vsub.f32 %v418, %v428
  %v443 = vsub.f32 %v419, %v430
  %v444 = vsub.f32 %v420, %v432
  %v445 = vsub.f32 %v421, %v434
  %v446 = vsub.f32 %v422, %v436
  %v447 = vsub.f32 %v423, %v438
  %v448 = vsub.f32 %v424, %v440
  %v449 = vmul.f32 %v441, 1.442695
  %v450 = vpow.pop %v449
  %v451 = vmul.f32 %v442, 1.442695
  %v452 = vpow.pop %v451
  %v453 = vmul.f32 %v443, 1.442695
  %v454 = vpow.pop %v453
  %v455 = vmul.f32 %v444, 1.442695
  %v456 = vpow.pop %v455
  %v457 = vmul.f32 %v445, 1.442695
  %v458 = vpow.pop %v457
  %v459 = vmul.f32 %v446, 1.442695
  %v460 = vpow.pop %v459
  %v461 = vmul.f32 %v447, 1.442695
  %v462 = vpow.pop %v461
  %v463 = vmul.f32 %v448, 1.442695
  %v464 = vpow.pop %v463
  %v465 = vsel %vm416, %v450, 0.0
  %v466 = vsel %vm416, %v452, 0.0
  %v467 = vsel %vm416, %v454, 0.0
  %v468 = vsel %vm416, %v456, 0.0
  %v469 = vsel %vm416, %v458, 0.0
  %v470 = vsel %vm416, %v460, 0.0
  %v471 = vsel %vm416, %v462, 0.0
  %v472 = vsel %vm416, %v464, 0.0
  %473 = vadd.xlane.f32.xlu0 %v465
  %v474 = vpop.xlane.xlu0 %473
  %475 = vadd.xlane.f32.xlu0 %v466
  %v476 = vpop.xlane.xlu0 %475
  %477 = vadd.xlane.f32.xlu0 %v467
  %v478 = vpop.xlane.xlu0 %477
  %479 = vadd.xlane.f32.xlu0 %v468
  %v480 = vpop.xlane.xlu0 %479
  %481 = vadd.xlane.f32.xlu0 %v469
  %v482 = vpop.xlane.xlu0 %481
  %483 = vadd.xlane.f32.xlu0 %v470
  %v484 = vpop.xlane.xlu0 %483
  %485 = vadd.xlane.f32.xlu0 %v471
  %v486 = vpop.xlane.xlu0 %485
  %487 = vadd.xlane.f32.xlu0 %v472
  %v488 = vpop.xlane.xlu0 %487
  %v489 = vlog2.pop %v474
  %v490 = vmul.f32 %v489, 0.6931472
  %v491 = vlog2.pop %v476
  %v492 = vmul.f32 %v491, 0.6931472
  %v493 = vlog2.pop %v478
  %v494 = vmul.f32 %v493, 0.6931472
  %v495 = vlog2.pop %v480
  %v496 = vmul.f32 %v495, 0.6931472
  %v497 = vlog2.pop %v482
  %v498 = vmul.f32 %v497, 0.6931472
  %v499 = vlog2.pop %v484
  %v500 = vmul.f32 %v499, 0.6931472
  %v501 = vlog2.pop %v486
  %v502 = vmul.f32 %v501, 0.6931472
  %v503 = vlog2.pop %v488
  %v504 = vmul.f32 %v503, 0.6931472
  %v505 = vsub.f32 %v441, %v490
  %v506 = vsub.f32 %v442, %v492
  %v507 = vsub.f32 %v443, %v494
  %v508 = vsub.f32 %v444, %v496
  %v509 = vsub.f32 %v445, %v498
  %v510 = vsub.f32 %v446, %v500
  %v511 = vsub.f32 %v447, %v502
  %v512 = vsub.f32 %v448, %v504
  %513 = vst [vmem:[%s6] sm:$0xff] %v505
  %514 = vst [vmem:[%s6 + $0x8] sm:$0xff] %v506
  %515 = vst [vmem:[%s6 + $0x10] sm:$0xff] %v507
  %516 = vst [vmem:[%s6 + $0x18] sm:$0xff] %v508
  %517 = vst [vmem:[%s6 + $0x20] sm:$0xff] %v509
  %518 = vst [vmem:[%s6 + $0x28] sm:$0xff] %v510
  %519 = vst [vmem:[%s6 + $0x30] sm:$0xff] %v511
  %520 = vst [vmem:[%s6 + $0x38] sm:$0xff] %v512
  // Predicated region
  $region26: #{hypergcn_forward.1} parent=0 // pred_check
    _
  $region27: #{hypergcn_forward.1} parent=0 // pred_check_branch
    %522 = sbr.rel (0) target = $region29
  $region28: #{hypergcn_forward.1} parent=0 // pred_region
    _
  $region29: #{hypergcn_forward.1} parent=0 // pred_fallthru
    _
  // Predicated region
  $region30: #{hypergcn_forward.1} parent=0 // pred_check
    _
  $region31: #{hypergcn_forward.1} parent=0 // pred_check_branch
    %524 = sbr.rel (0) target = $region33
  $region32: #{hypergcn_forward.1} parent=0 // pred_region
    _
  $region33: #{hypergcn_forward.1} parent=0 // pred_fallthru
    _

</llo_original>
